<compile_context>
chip_gen: v7x
topology: tpu7x:2x2x1
jax: 0.10.0
libtpu: 0.0.40
codegen_flags: <defaults>
</compile_context>

<pallas_src>
import functools

import jax
import jax.numpy as jnp
from jax.experimental import pallas as pl
from jax.experimental.pallas import tpu as pltpu

LANE = 128
ROW_PACK = 16  # bf16 packs 16 rows per vreg


def _round_up(v, m):
    return (v + m - 1) // m * m


def _cdiv(a, b):
    return -(-a // b)


def _dnn_kernel(x_ref, w1_ref, b1_ref, w2_ref, b2_ref, w3_ref, b3_ref, o_ref):
    # fc1 (+ dropout p=0 == identity) -> ReLU. bf16 MXU matmul, f32 accumulate.
    x = x_ref[...].astype(jnp.bfloat16)            # in-kernel cast (VPU filler)
    h = jnp.dot(x, w1_ref[...], preferred_element_type=jnp.float32)
    h = jnp.maximum(h + b1_ref[...], 0.0)
    # fc2 -> ReLU
    h = jnp.dot(h.astype(jnp.bfloat16), w2_ref[...],
                preferred_element_type=jnp.float32)
    h = jnp.maximum(h + b2_ref[...], 0.0)
    # fc3 (no activation)
    out = jnp.dot(h.astype(jnp.bfloat16), w3_ref[...],
                  preferred_element_type=jnp.float32)
    o_ref[...] = (out + b3_ref[...]).astype(o_ref.dtype)


def _device_budgets():
    """(tile+weight VMEM budget, TM cap, vmem_limit cap) per TPU generation."""
    try:
        kind = jax.devices()[0].device_kind.lower()
    except Exception:
        kind = ""
    if any(t in kind for t in ("v4", "v5", "v6")):
        # 128 MiB physical VMEM: large batch tiles are cheap and amortize the
        # ~0.35us per-grid-step overhead.
        return 56 << 20, 1024, 96 << 20
    # v7x (64 MiB per TensorCore) or unknown generation: stay conservative.
    return 26 << 20, 512, 40 << 20


def prepare_params(params):
    """One-time pad to lane-aligned shapes + bf16 weight cast.

    Hoisted out of the per-call forward (perf review): these pads/casts are
    one-time HBM work, not per-forward XLA launches. Weights stored (in, out);
    biases (1, out). Padded rows/cols are zero, so padded lanes stay zero
    through bias-add and ReLU.
    """
    w1, b1, w2, b2, w3, b3 = params
    in_dim, n_hid = w1.shape
    out_dim = w3.shape[1]
    hid_p = _round_up(n_hid, LANE)
    out_p = _round_up(out_dim, LANE)

    def pad_w(w, rows, cols):
        buf = jnp.zeros((rows, cols), jnp.bfloat16)
        return buf.at[:w.shape[0], :w.shape[1]].set(w.astype(jnp.bfloat16))

    def pad_b(b, cols):
        buf = jnp.zeros((1, cols), jnp.float32)
        return buf.at[:, :b.shape[-1]].set(b.reshape(1, -1).astype(jnp.float32))

    return (pad_w(w1, in_dim, hid_p), pad_b(b1, hid_p),
            pad_w(w2, hid_p, hid_p), pad_b(b2, hid_p),
            pad_w(w3, hid_p, out_p), pad_b(b3, out_p))


@functools.partial(jax.jit, static_argnames=("in_dim", "out_dim"))
def dnn_forward(x, padded_params, in_dim, out_dim):
    """Matches torch: x.view(-1, in_dim) -> fc1 -> relu -> fc2 -> relu -> fc3."""
    w1p, b1p, w2p, b2p, w3p, b3p = padded_params
    hid_p = w1p.shape[1]
    out_p = w3p.shape[1]

    x2d = x.reshape(-1, in_dim).astype(jnp.float32)
    n = x2d.shape[0]

    budget, tm_max, vmem_cap = _device_budgets()

    # ---- VMEM accounting (grid-invariant inputs still count double-buffered).
    weight_bytes = 2 * (w1p.size + w2p.size + w3p.size)       # bf16
    bias_bytes = 4 * (b1p.size + b2p.size + b3p.size)         # f32
    resident = 2 * (weight_bytes + bias_bytes)
    per_row = (2 * in_dim * 4       # double-buffered f32 x tile
               + 2 * out_p * 2      # double-buffered bf16 out tile
               + 2 * hid_p * 4      # two live f32 (tm, hid_p) intermediates
               + hid_p * 2)         # bf16-cast activation fed to next matmul
    tm_cap = max(ROW_PACK,
                 ((budget - resident) // per_row // ROW_PACK) * ROW_PACK)
    # NOTE: for very large n_hid (resident weights approaching the VMEM budget,
    # esp. on v7x's 64 MiB/TC) this kernel should grow a hidden-dim grid axis
    # (K/N tiling + f32 accumulator scratch) instead of keeping all three
    # weight matrices VMEM-resident. Not needed at these sizes.

    # ---- Batch tile: >=2 blocks whenever possible (megacore on v7x), bounded
    # last-tile waste, multiple of 16 rows (bf16 packing).
    tm_hw = min(tm_max, tm_cap)
    n_blocks = max(2, _cdiv(n, tm_hw))
    tm = min(_round_up(max(_cdiv(n, n_blocks), 1), ROW_PACK), tm_hw)
    if tm >= 512 and tm % 256:
        tm = (tm // 256) * 256       # MXU-cadence-friendly when batch allows
    n_pad = _round_up(n, tm)

    xp = x2d if n_pad == n else (
        jnp.zeros((n_pad, in_dim), jnp.float32).at[:n].set(x2d))

    vmem_limit = int(min(max(resident + tm * per_row + (4 << 20), 16 << 20),
                         vmem_cap))
    flops = 2 * n_pad * (in_dim * hid_p + hid_p * hid_p + hid_p * out_p)
    bytes_accessed = int(xp.size * 4 + weight_bytes + bias_bytes
                         + n_pad * out_p * 2)

    out_padded = pl.pallas_call(
        _dnn_kernel,
        out_shape=jax.ShapeDtypeStruct((n_pad, out_p), jnp.bfloat16),
        grid=(n_pad // tm,),
        in_specs=[
            # Activations: batch-tiled, last dim == full in_dim (no lane pad).
            pl.BlockSpec((tm, in_dim), lambda i: (i, 0)),
            # Weights / biases: constant index_map -> grid-invariant, DMA'd
            # once and kept VMEM-resident across all batch tiles.
            pl.BlockSpec(w1p.shape, lambda i: (0, 0)),
            pl.BlockSpec(b1p.shape, lambda i: (0, 0)),
            pl.BlockSpec(w2p.shape, lambda i: (0, 0)),
            pl.BlockSpec(b2p.shape, lambda i: (0, 0)),
            pl.BlockSpec(w3p.shape, lambda i: (0, 0)),
            pl.BlockSpec(b3p.shape, lambda i: (0, 0)),
        ],
        out_specs=pl.BlockSpec((tm, out_p), lambda i: (i, 0)),
        compiler_params=pltpu.CompilerParams(
            dimension_semantics=("parallel",),   # megacore sharding on v7x
            vmem_limit_bytes=vmem_limit,
        ),
        cost_estimate=pl.CostEstimate(
            flops=flops, transcendentals=0, bytes_accessed=bytes_accessed),
    )(xp, w1p, b1p, w2p, b2p, w3p, b3p)

    # Column slice of the lane-padded bf16 tile; the f32 upcast fuses into it.
    return out_padded[:n, :out_dim].astype(jnp.float32)


def init_params(key, in_dim, out_dim, n_hid):
    """Deterministic init mirroring nn.Linear shapes; weights stored (in, out)."""
    ks = jax.random.split(key, 6)

    def linear(kw, kb, fan_in, fan_out):
        bound = 1.0 / jnp.sqrt(fan_in)
        # torch stores weight as (out, in); we store the transpose (in, out).
        w = jax.random.uniform(kw, (fan_in, fan_out), jnp.float32, -bound, bound)
        b = jax.random.uniform(kb, (1, fan_out), jnp.float32, -bound, bound)
        return w, b

    w1, b1 = linear(ks[0], ks[1], in_dim, n_hid)
    w2, b2 = linear(ks[2], ks[3], n_hid, n_hid)
    w3, b3 = linear(ks[4], ks[5], n_hid, out_dim)
    return (w1, b1, w2, b2, w3, b3)


if __name__ == "__main__":
    in_dim, out_dim, n_hid = 32, 16, 32

    key = jax.random.PRNGKey(0)
    k_x, k_p = jax.random.split(key)
    params = init_params(k_p, in_dim, out_dim, n_hid)

    # One-time weight prep (padding + bf16 cast) outside the forward path.
    padded_params = prepare_params(params)
    padded_params = jax.block_until_ready(padded_params)

    # x of shape (2, 4, 32): forward flattens to (8, 32) like x.view(-1, in_dim)
    x = jax.random.normal(k_x, (2, 4, in_dim), dtype=jnp.float32)

    out = dnn_forward(x, padded_params, in_dim, out_dim)
    jax.block_until_ready(out)

    # Pure-JAX reference mirroring the kernel's numerics (bf16 weights /
    # activations, f32 accumulation, bf16 store, f32 upcast).
    w1, b1, w2, b2, w3, b3 = params
    xr = x.reshape(-1, in_dim)
    bf = jnp.bfloat16
    h = jnp.dot(xr.astype(bf), w1.astype(bf),
                preferred_element_type=jnp.float32) + b1
    h = jnp.maximum(h, 0.0)
    h = jnp.dot(h.astype(bf), w2.astype(bf),
                preferred_element_type=jnp.float32) + b2
    h = jnp.maximum(h, 0.0)
    ref = jnp.dot(h.astype(bf), w3.astype(bf),
                  preferred_element_type=jnp.float32) + b3
    ref = ref.astype(bf).astype(jnp.float32)

    assert out.shape == (8, out_dim), out.shape
    assert out.dtype == jnp.float32, out.dtype
    assert jnp.allclose(out, ref, atol=2e-2, rtol=2e-2), \
        float(jnp.max(jnp.abs(out - ref)))

    print("KERNEL_OK")
</pallas_src>

<mosaic_0001>
module attributes {stable_mosaic.version = 11 : i64} {
  func.func @_dnn_kernel(%arg0: i32, %arg1: memref<16x32xf32, #tpu.memory_space<vmem>>, %arg2: memref<32x128xbf16, #tpu.memory_space<vmem>>, %arg3: memref<1x128xf32, #tpu.memory_space<vmem>>, %arg4: memref<128x128xbf16, #tpu.memory_space<vmem>>, %arg5: memref<1x128xf32, #tpu.memory_space<vmem>>, %arg6: memref<128x128xbf16, #tpu.memory_space<vmem>>, %arg7: memref<1x128xf32, #tpu.memory_space<vmem>>, %arg8: memref<16x128xbf16, #tpu.memory_space<vmem>>) attributes {dimension_semantics = [#tpu.dimension_semantics<parallel>], iteration_bounds = array<i64: 1>, scalar_prefetch = 0 : i64, scratch_operands = 0 : i64, tpu.core_type = #tpu.core_type<tc>, window_params = [{transform_indices = @transform_0, window_bounds = array<i64: 16, 32>}, {pipeline_mode = #tpu.pipeline_mode<synchronous>, transform_indices = @transform_1, window_bounds = array<i64: 32, 128>}, {pipeline_mode = #tpu.pipeline_mode<synchronous>, transform_indices = @transform_2, window_bounds = array<i64: 1, 128>}, {pipeline_mode = #tpu.pipeline_mode<synchronous>, transform_indices = @transform_3, window_bounds = array<i64: 128, 128>}, {pipeline_mode = #tpu.pipeline_mode<synchronous>, transform_indices = @transform_4, window_bounds = array<i64: 1, 128>}, {pipeline_mode = #tpu.pipeline_mode<synchronous>, transform_indices = @transform_5, window_bounds = array<i64: 128, 128>}, {pipeline_mode = #tpu.pipeline_mode<synchronous>, transform_indices = @transform_6, window_bounds = array<i64: 1, 128>}, {transform_indices = @transform_7, window_bounds = array<i64: 16, 128>}]} {
    %c0 = arith.constant 0 : index
    %c0_0 = arith.constant 0 : index
    %0 = vector.load %arg1[%c0, %c0_0] : memref<16x32xf32, #tpu.memory_space<vmem>>, vector<16x32xf32>
    %1 = arith.truncf %0 : vector<16x32xf32> to vector<16x32xbf16>
    %c0_1 = arith.constant 0 : index
    %c0_2 = arith.constant 0 : index
    %2 = vector.load %arg2[%c0_1, %c0_2] : memref<32x128xbf16, #tpu.memory_space<vmem>>, vector<32x128xbf16>
    %cst = arith.constant dense<0.000000e+00> : vector<16x128xf32>
    %3 = tpu.matmul %1, %2, %cst {dimension_numbers = #tpu.dot_dimension_numbers<[1], [0], [0], [1], [0, 0, 1, 1], [], []>} : vector<16x32xbf16>, vector<32x128xbf16>, vector<16x128xf32> -> vector<16x128xf32>
    %c0_3 = arith.constant 0 : index
    %c0_4 = arith.constant 0 : index
    %4 = vector.load %arg3[%c0_3, %c0_4] : memref<1x128xf32, #tpu.memory_space<vmem>>, vector<1x128xf32>
    %5 = vector.broadcast %4 : vector<1x128xf32> to vector<16x128xf32>
    %6 = arith.addf %3, %5 : vector<16x128xf32>
    %cst_5 = arith.constant 0.000000e+00 : f32
    %7 = vector.broadcast %cst_5 : f32 to vector<16x128xf32>
    %8 = arith.maximumf %6, %7 : vector<16x128xf32>
    %9 = arith.truncf %8 : vector<16x128xf32> to vector<16x128xbf16>
    %c0_6 = arith.constant 0 : index
    %c0_7 = arith.constant 0 : index
    %10 = vector.load %arg4[%c0_6, %c0_7] : memref<128x128xbf16, #tpu.memory_space<vmem>>, vector<128x128xbf16>
    %cst_8 = arith.constant dense<0.000000e+00> : vector<16x128xf32>
    %11 = tpu.matmul %9, %10, %cst_8 {dimension_numbers = #tpu.dot_dimension_numbers<[1], [0], [0], [1], [0, 0, 1, 1], [], []>} : vector<16x128xbf16>, vector<128x128xbf16>, vector<16x128xf32> -> vector<16x128xf32>
    %c0_9 = arith.constant 0 : index
    %c0_10 = arith.constant 0 : index
    %12 = vector.load %arg5[%c0_9, %c0_10] : memref<1x128xf32, #tpu.memory_space<vmem>>, vector<1x128xf32>
    %13 = vector.broadcast %12 : vector<1x128xf32> to vector<16x128xf32>
    %14 = arith.addf %11, %13 : vector<16x128xf32>
    %cst_11 = arith.constant 0.000000e+00 : f32
    %15 = vector.broadcast %cst_11 : f32 to vector<16x128xf32>
    %16 = arith.maximumf %14, %15 : vector<16x128xf32>
    %17 = arith.truncf %16 : vector<16x128xf32> to vector<16x128xbf16>
    %c0_12 = arith.constant 0 : index
    %c0_13 = arith.constant 0 : index
    %18 = vector.load %arg6[%c0_12, %c0_13] : memref<128x128xbf16, #tpu.memory_space<vmem>>, vector<128x128xbf16>
    %cst_14 = arith.constant dense<0.000000e+00> : vector<16x128xf32>
    %19 = tpu.matmul %17, %18, %cst_14 {dimension_numbers = #tpu.dot_dimension_numbers<[1], [0], [0], [1], [0, 0, 1, 1], [], []>} : vector<16x128xbf16>, vector<128x128xbf16>, vector<16x128xf32> -> vector<16x128xf32>
    %c0_15 = arith.constant 0 : index
    %c0_16 = arith.constant 0 : index
    %20 = vector.load %arg7[%c0_15, %c0_16] : memref<1x128xf32, #tpu.memory_space<vmem>>, vector<1x128xf32>
    %21 = vector.broadcast %20 : vector<1x128xf32> to vector<16x128xf32>
    %22 = arith.addf %19, %21 : vector<16x128xf32>
    %23 = arith.truncf %22 : vector<16x128xf32> to vector<16x128xbf16>
    %c0_17 = arith.constant 0 : index
    %c0_18 = arith.constant 0 : index
    %24 = vector.load %arg8[%c0_17, %c0_18] : memref<16x128xbf16, #tpu.memory_space<vmem>>, vector<16x128xbf16>
    tpu.vector_store %arg8[%c0_17, %c0_18], %23 {strides = array<i32>} : memref<16x128xbf16, #tpu.memory_space<vmem>>, vector<16x128xbf16>,
    return
  }
  func.func @transform_0(%arg0: i32) -> (i32, i32) {
    %c0_i32 = arith.constant 0 : i32
    %c0_i32_0 = arith.constant 0 : i32
    return %arg0, %c0_i32 : i32, i32
  }
  func.func @transform_1(%arg0: i32) -> (i32, i32) {
    %c0_i32 = arith.constant 0 : i32
    %c0_i32_0 = arith.constant 0 : i32
    %c0_i32_1 = arith.constant 0 : i32
    return %c0_i32, %c0_i32_0 : i32, i32
  }
  func.func @transform_2(%arg0: i32) -> (i32, i32) {
    %c0_i32 = arith.constant 0 : i32
    %c0_i32_0 = arith.constant 0 : i32
    %c0_i32_1 = arith.constant 0 : i32
    return %c0_i32, %c0_i32_0 : i32, i32
  }
  func.func @transform_3(%arg0: i32) -> (i32, i32) {
    %c0_i32 = arith.constant 0 : i32
    %c0_i32_0 = arith.constant 0 : i32
    %c0_i32_1 = arith.constant 0 : i32
    return %c0_i32, %c0_i32_0 : i32, i32
  }
  func.func @transform_4(%arg0: i32) -> (i32, i32) {
    %c0_i32 = arith.constant 0 : i32
    %c0_i32_0 = arith.constant 0 : i32
    %c0_i32_1 = arith.constant 0 : i32
    return %c0_i32, %c0_i32_0 : i32, i32
  }
  func.func @transform_5(%arg0: i32) -> (i32, i32) {
    %c0_i32 = arith.constant 0 : i32
    %c0_i32_0 = arith.constant 0 : i32
    %c0_i32_1 = arith.constant 0 : i32
    return %c0_i32, %c0_i32_0 : i32, i32
  }
  func.func @transform_6(%arg0: i32) -> (i32, i32) {
    %c0_i32 = arith.constant 0 : i32
    %c0_i32_0 = arith.constant 0 : i32
    %c0_i32_1 = arith.constant 0 : i32
    return %c0_i32, %c0_i32_0 : i32, i32
  }
  func.func @transform_7(%arg0: i32) -> (i32, i32) {
    %c0_i32 = arith.constant 0 : i32
    %c0_i32_0 = arith.constant 0 : i32
    return %arg0, %c0_i32 : i32, i32
  }
}

</mosaic_0001>

<llo_original>
// kernel: dnn_forward.1
$region0: #{dnn_forward.1}
  #allocation0 [shape = 'u32[]', space=smem, size = 0x4, offset = 0x4, fixed_abs, tag = 'smem constant byte address 0x4 - core index']
  #allocation1 [shape = 'u32[144,128]{1,0:T(1,128)}', space=vmem, size = 0x12000, scoped, tag = 'internal scratch']
  %s0 = inlined_call_operand.vmem [shape: f32[16,32], index: 0, kind: input, shape index: {}]
  %s1 = inlined_call_operand.vmem [shape: bf16[32,128], index: 1, kind: input, shape index: {}]
  %s2 = inlined_call_operand.vmem [shape: f32[1,128], index: 2, kind: input, shape index: {}]
  %s3 = inlined_call_operand.hbm [shape: bf16[128,128], index: 3, kind: input, shape index: {}]
  %s4 = inlined_call_operand.vmem [shape: f32[1,128], index: 4, kind: input, shape index: {}]
  %s5 = inlined_call_operand.hbm [shape: bf16[128,128], index: 5, kind: input, shape index: {}]
  %s6 = inlined_call_operand.vmem [shape: f32[1,128], index: 6, kind: input, shape index: {}]
  %s7 = inlined_call_operand.vmem [shape: bf16[16,128], index: 7, kind: output, shape index: {}]
  %s8 = sld [smem:[#allocation0]]
  $region46: #{dnn_forward.1} parent=0
    _
  %s10 = ssub.s32 1, %s8
  %s11 = scalar_select 0, %s10, %s8
  $region1: #{dnn_forward.1} parent=0
    #allocation2 [shape = 'u8[32768]{0}', space=vmem, size = 0x8000, scoped, tag = 'input window, operand 3, single buffered']
    #allocation3 [shape = 's32[1]{0}', space=sflag, size = 0x4, scoped, tag = 'scoped memory for dnn_forward.1']
    #allocation4 [shape = 'u8[32768]{0}', space=vmem, size = 0x8000, scoped, tag = 'input window, operand 5, single buffered']
    #allocation5 [shape = 's32[1]{0}', space=sflag, size = 0x4, scoped, tag = 'scoped memory for dnn_forward.1']
    %12 = vsyncpa [#allocation3], 0
    %13 = vsyncpa [#allocation5], 0
    // Predicated region
    $region2: #{dnn_forward.1} parent=1 // pred_check
      _
    $region3: #{dnn_forward.1} parent=1 // pred_check_branch
      %15 = sbr.rel (0) target = $region5
    $region4: #{dnn_forward.1} parent=1 // pred_region
      _
    $region5: #{dnn_forward.1} parent=1 // pred_fallthru
      _
    // Predicated region
    $region6: #{dnn_forward.1} parent=1 // pred_check
      _
    $region7: #{dnn_forward.1} parent=1 // pred_check_branch
      %17 = sbr.rel (0) target = $region9
    $region8: #{dnn_forward.1} parent=1 // pred_region
      _
    $region9: #{dnn_forward.1} parent=1 // pred_fallthru
      _
    // Predicated region
    $region10: #{dnn_forward.1} parent=1 // pred_check
      _
    $region11: #{dnn_forward.1} parent=1 // pred_check_branch
      %19 = sbr.rel (0) target = $region13
    $region12: #{dnn_forward.1} parent=1 // pred_region
      _
    $region13: #{dnn_forward.1} parent=1 // pred_fallthru
      _
    // Predicated region
    $region14: #{dnn_forward.1} parent=1 // pred_check
      _
    $region15: #{dnn_forward.1} parent=1 // pred_check_branch
      %21 = sbr.rel (0) target = $region17
    $region16: #{dnn_forward.1} parent=1 // pred_region
      %s23 = ssub.s32 1024, 1024
      %24 = vsyncadd [#allocation3], %s23
      %s25 = sshll.u32 [#allocation2], 4
      %s26 = int_to_ptr.vmem [resolvable:$true] %s25
      %31 = dma.hbm_to_vmem [thread:$0]  %s3, 1024, %s26, [#allocation3], 64, 64, 4
    $region17: #{dnn_forward.1} parent=1 // pred_fallthru
      _
    // Predicated region
    $region18: #{dnn_forward.1} parent=1 // pred_check
      _
    $region19: #{dnn_forward.1} parent=1 // pred_check_branch
      %33 = sbr.rel (0) target = $region21
    $region20: #{dnn_forward.1} parent=1 // pred_region
      _
    $region21: #{dnn_forward.1} parent=1 // pred_fallthru
      _
    // Predicated region
    $region22: #{dnn_forward.1} parent=1 // pred_check
      _
    $region23: #{dnn_forward.1} parent=1 // pred_check_branch
      %35 = sbr.rel (0) target = $region25
    $region24: #{dnn_forward.1} parent=1 // pred_region
      %s37 = ssub.s32 1024, 1024
      %38 = vsyncadd [#allocation5], %s37
      %s39 = sshll.u32 [#allocation4], 4
      %s40 = int_to_ptr.vmem [resolvable:$true] %s39
      %45 = dma.hbm_to_vmem [thread:$0]  %s5, 1024, %s40, [#allocation5], 64, 64, 4
    $region25: #{dnn_forward.1} parent=1 // pred_fallthru
      _
    // Predicated region
    $region26: #{dnn_forward.1} parent=1 // pred_check
      _
    $region27: #{dnn_forward.1} parent=1 // pred_check_branch
      %47 = sbr.rel (0) target = $region29
    $region28: #{dnn_forward.1} parent=1 // pred_region
      _
    $region29: #{dnn_forward.1} parent=1 // pred_fallthru
      _
    // Predicated region
    $region30: #{dnn_forward.1} parent=1 // pred_check
      _
    $region31: #{dnn_forward.1} parent=1 // pred_check_branch
      %49 = sbr.rel (0) target = $region33
    $region32: #{dnn_forward.1} parent=1 // pred_region
      %50 = dma.done [#allocation3], 1024
    $region33: #{dnn_forward.1} parent=1 // pred_fallthru
      _
    // Predicated region
    $region34: #{dnn_forward.1} parent=1 // pred_check
      _
    $region35: #{dnn_forward.1} parent=1 // pred_check_branch
      %52 = sbr.rel (0) target = $region37
    $region36: #{dnn_forward.1} parent=1 // pred_region
      %53 = dma.done [#allocation5], 1024
    $region37: #{dnn_forward.1} parent=1 // pred_fallthru
      _
    %v55 = vld [vmem:[%s0] sm:$0xff]
    %v56 = vld [vmem:[%s0 + $0x8] sm:$0xff]
    %v57 = vpack.c.bf16 %v56, %v55
    %v58 = vld [vmem:[%s1] sm:$0xf]
    %v59 = vld [vmem:[%s1 + $0x4] sm:$0xf]
    %v60 = vld [vmem:[%s1 + $0x8] sm:$0xf]
    %v61 = vld [vmem:[%s1 + $0xc] sm:$0xf]
    %v62 = vld [vmem:[%s2] sm:$0x1]
    %v64 = vlaneseq
    %v65 = vshrl.u32 %v64, 7
    %v66 = vsub.s32 0, %v65
    %v67 = vrot.slane %v62, %v66
    %v73 = vunpack.c.l.b16 %v58
    %v74 = vunpack.c.l.b16 %v59
    %v75 = vunpack.c.l.b16 %v60
    %v76 = vunpack.c.l.b16 %v61
    %v77 = vpack.c.b16 %v74, %v73
    %v78 = vpack.c.b16 %v76, %v75
    %vm81 = vcmask 261120
    %v83 = vsel %vm81, %v57, 0
    %85 = vmatprep.subr.bf16.mxu0 0
    %86 = vmatpush1.bf16.msra.mxu0 %v77
    %87 = vmatprep.subr.bf16.mxu0 0
    %88 = vmatpush1.bf16.msra.mxu0 %v78
    %89 = vmatprep.subr.bf16.mxu0 0
    %90 = vmatpush1.bf16.msra.mxu0 0
    %91 = vmatprep.subr.bf16.mxu0 0
    %92 = vmatpush1.bf16.msra.mxu0 0
    %93 = vmatprep.subr.bf16.mxu0 0
    %94 = vmatpush1.bf16.msra.mxu0 0
    %95 = vmatprep.subr.bf16.mxu0 0
    %96 = vmatpush1.bf16.msra.mxu0 0
    %97 = vmatprep.subr.bf16.mxu0 0
    %98 = vmatpush1.bf16.msra.mxu0 0
    %99 = vmatprep.subr.bf16.mxu0 0
    %100 = vmatpush1.bf16.msra.mxu0 0
    %101 = vmatprep.subr.bf16.mxu0 0
    %102 = vmatpush1.bf16.msra.mxu0 0
    %103 = vmatprep.subr.bf16.mxu0 0
    %104 = vmatpush1.bf16.msra.mxu0 0
    %105 = vmatprep.subr.bf16.mxu0 0
    %106 = vmatpush1.bf16.msra.mxu0 0
    %107 = vmatprep.subr.bf16.mxu0 0
    %108 = vmatpush1.bf16.msra.mxu0 0
    %109 = vmatprep.subr.bf16.mxu0 0
    %110 = vmatpush1.bf16.msra.mxu0 0
    %111 = vmatprep.subr.bf16.mxu0 0
    %112 = vmatpush1.bf16.msra.mxu0 0
    %113 = vmatprep.subr.bf16.mxu0 0
    %114 = vmatpush1.bf16.msra.mxu0 0
    %115 = vmatprep.subr.bf16.mxu0 0
    %116 = vmatpush1.bf16.msra.mxu0 0
    %117 = vmatprep.mubr.bf16.mxu0 0
    %118 = vmatmul.mubr.bf16.gmra.mrb[0].mxu0 %v83
    %v119 = vpop.f32.mrb[0].mxu0
    %v120 = vadd.f32 %v67, %v119
    %v121 = vpop.f32.mrb[0].mxu0
    %v122 = vpop.f32.mrb[0].mxu0
    %v123 = vadd.f32 %v67, %v122
    %v124 = vpop.f32.mrb[0].mxu0
    %125 = vdwg.mxu0
    %v126 = vmax.f32 %v120, 0.0
    %v127 = vmax.f32 %v123, 0.0
    %v128 = vpack.c.bf16 %v127, %v126
    %v129 = vld [vmem:[#allocation2] sm:$0xf]
    %v130 = vld [vmem:[#allocation2 + $0x4] sm:$0xf]
    %v131 = vld [vmem:[#allocation2 + $0x8] sm:$0xf]
    %v132 = vld [vmem:[#allocation2 + $0xc] sm:$0xf]
    %v133 = vld [vmem:[#allocation2 + $0x10] sm:$0xf]
    %v134 = vld [vmem:[#allocation2 + $0x14] sm:$0xf]
    %v135 = vld [vmem:[#allocation2 + $0x18] sm:$0xf]
    %v136 = vld [vmem:[#allocation2 + $0x1c] sm:$0xf]
    %v137 = vld [vmem:[#allocation2 + $0x20] sm:$0xf]
    %v138 = vld [vmem:[#allocation2 + $0x24] sm:$0xf]
    %v139 = vld [vmem:[#allocation2 + $0x28] sm:$0xf]
    %v140 = vld [vmem:[#allocation2 + $0x2c] sm:$0xf]
    %v141 = vld [vmem:[#allocation2 + $0x30] sm:$0xf]
    %v142 = vld [vmem:[#allocation2 + $0x34] sm:$0xf]
    %v143 = vld [vmem:[#allocation2 + $0x38] sm:$0xf]
    %v144 = vld [vmem:[#allocation2 + $0x3c] sm:$0xf]
    %v145 = vld [vmem:[%s4] sm:$0x1]
    %v147 = vlaneseq
    %v148 = vshrl.u32 %v147, 7
    %v149 = vsub.s32 0, %v148
    %v150 = vrot.slane %v145, %v149
    %v168 = vunpack.c.l.b16 %v129
    %v169 = vunpack.c.l.b16 %v130
    %v170 = vunpack.c.l.b16 %v131
    %v171 = vunpack.c.l.b16 %v132
    %v172 = vunpack.c.l.b16 %v133
    %v173 = vunpack.c.l.b16 %v134
    %v174 = vunpack.c.l.b16 %v135
    %v175 = vunpack.c.l.b16 %v136
    %v176 = vunpack.c.l.b16 %v137
    %v177 = vunpack.c.l.b16 %v138
    %v178 = vunpack.c.l.b16 %v139
    %v179 = vunpack.c.l.b16 %v140
    %v180 = vunpack.c.l.b16 %v141
    %v181 = vunpack.c.l.b16 %v142
    %v182 = vunpack.c.l.b16 %v143
    %v183 = vunpack.c.l.b16 %v144
    %v184 = vpack.c.b16 %v169, %v168
    %v185 = vpack.c.b16 %v171, %v170
    %v186 = vpack.c.b16 %v173, %v172
    %v187 = vpack.c.b16 %v175, %v174
    %v188 = vpack.c.b16 %v177, %v176
    %v189 = vpack.c.b16 %v179, %v178
    %v190 = vpack.c.b16 %v181, %v180
    %v191 = vpack.c.b16 %v183, %v182
    %200 = vmatprep.subr.bf16.mxu0 0
    %201 = vmatpush1.bf16.msra.mxu0 %v184
    %202 = vmatprep.subr.bf16.mxu0 0
    %203 = vmatpush1.bf16.msra.mxu0 %v185
    %204 = vmatprep.subr.bf16.mxu0 0
    %205 = vmatpush1.bf16.msra.mxu0 %v186
    %206 = vmatprep.subr.bf16.mxu0 0
    %207 = vmatpush1.bf16.msra.mxu0 %v187
    %208 = vmatprep.subr.bf16.mxu0 0
    %209 = vmatpush1.bf16.msra.mxu0 %v188
    %210 = vmatprep.subr.bf16.mxu0 0
    %211 = vmatpush1.bf16.msra.mxu0 %v189
    %212 = vmatprep.subr.bf16.mxu0 0
    %213 = vmatpush1.bf16.msra.mxu0 %v190
    %214 = vmatprep.subr.bf16.mxu0 0
    %215 = vmatpush1.bf16.msra.mxu0 %v191
    %216 = vmatprep.subr.bf16.mxu0 0
    %217 = vmatpush1.bf16.msra.mxu0 0
    %218 = vmatprep.subr.bf16.mxu0 0
    %219 = vmatpush1.bf16.msra.mxu0 0
    %220 = vmatprep.subr.bf16.mxu0 0
    %221 = vmatpush1.bf16.msra.mxu0 0
    %222 = vmatprep.subr.bf16.mxu0 0
    %223 = vmatpush1.bf16.msra.mxu0 0
    %224 = vmatprep.subr.bf16.mxu0 0
    %225 = vmatpush1.bf16.msra.mxu0 0
    %226 = vmatprep.subr.bf16.mxu0 0
    %227 = vmatpush1.bf16.msra.mxu0 0
    %228 = vmatprep.subr.bf16.mxu0 0
    %229 = vmatpush1.bf16.msra.mxu0 0
    %230 = vmatprep.subr.bf16.mxu0 0
    %231 = vmatpush1.bf16.msra.mxu0 0
    %232 = vmatprep.mubr.bf16.mxu0 0
    %233 = vmatmul.mubr.bf16.gmra.mrb[0].mxu0 %v128
    %v234 = vpop.f32.mrb[0].mxu0
    %v235 = vadd.f32 %v150, %v234
    %v236 = vpop.f32.mrb[0].mxu0
    %v237 = vpop.f32.mrb[0].mxu0
    %v238 = vadd.f32 %v150, %v237
    %v239 = vpop.f32.mrb[0].mxu0
    %240 = vdwg.mxu0
    %v241 = vmax.f32 %v235, 0.0
    %v242 = vmax.f32 %v238, 0.0
    %v243 = vpack.c.bf16 %v242, %v241
    %v244 = vld [vmem:[#allocation4] sm:$0xf]
    %v245 = vld [vmem:[#allocation4 + $0x4] sm:$0xf]
    %v246 = vld [vmem:[#allocation4 + $0x8] sm:$0xf]
    %v247 = vld [vmem:[#allocation4 + $0xc] sm:$0xf]
    %v248 = vld [vmem:[#allocation4 + $0x10] sm:$0xf]
    %v249 = vld [vmem:[#allocation4 + $0x14] sm:$0xf]
    %v250 = vld [vmem:[#allocation4 + $0x18] sm:$0xf]
    %v251 = vld [vmem:[#allocation4 + $0x1c] sm:$0xf]
    %v252 = vld [vmem:[#allocation4 + $0x20] sm:$0xf]
    %v253 = vld [vmem:[#allocation4 + $0x24] sm:$0xf]
    %v254 = vld [vmem:[#allocation4 + $0x28] sm:$0xf]
    %v255 = vld [vmem:[#allocation4 + $0x2c] sm:$0xf]
    %v256 = vld [vmem:[#allocation4 + $0x30] sm:$0xf]
    %v257 = vld [vmem:[#allocation4 + $0x34] sm:$0xf]
    %v258 = vld [vmem:[#allocation4 + $0x38] sm:$0xf]
    %v259 = vld [vmem:[#allocation4 + $0x3c] sm:$0xf]
    %v260 = vld [vmem:[%s6] sm:$0x1]
    %v262 = vlaneseq
    %v263 = vshrl.u32 %v262, 7
    %v264 = vsub.s32 0, %v263
    %v265 = vrot.slane %v260, %v264
    %v283 = vunpack.c.l.b16 %v244
    %v284 = vunpack.c.l.b16 %v245
    %v285 = vunpack.c.l.b16 %v246
    %v286 = vunpack.c.l.b16 %v247
    %v287 = vunpack.c.l.b16 %v248
    %v288 = vunpack.c.l.b16 %v249
    %v289 = vunpack.c.l.b16 %v250
    %v290 = vunpack.c.l.b16 %v251
    %v291 = vunpack.c.l.b16 %v252
    %v292 = vunpack.c.l.b16 %v253
    %v293 = vunpack.c.l.b16 %v254
    %v294 = vunpack.c.l.b16 %v255
    %v295 = vunpack.c.l.b16 %v256
    %v296 = vunpack.c.l.b16 %v257
    %v297 = vunpack.c.l.b16 %v258
    %v298 = vunpack.c.l.b16 %v259
    %v299 = vpack.c.b16 %v284, %v283
    %v300 = vpack.c.b16 %v286, %v285
    %v301 = vpack.c.b16 %v288, %v287
    %v302 = vpack.c.b16 %v290, %v289
    %v303 = vpack.c.b16 %v292, %v291
    %v304 = vpack.c.b16 %v294, %v293
    %v305 = vpack.c.b16 %v296, %v295
    %v306 = vpack.c.b16 %v298, %v297
    %315 = vmatprep.subr.bf16.mxu0 0
    %316 = vmatpush1.bf16.msra.mxu0 %v299
    %317 = vmatprep.subr.bf16.mxu0 0
    %318 = vmatpush1.bf16.msra.mxu0 %v300
    %319 = vmatprep.subr.bf16.mxu0 0
    %320 = vmatpush1.bf16.msra.mxu0 %v301
    %321 = vmatprep.subr.bf16.mxu0 0
    %322 = vmatpush1.bf16.msra.mxu0 %v302
    %323 = vmatprep.subr.bf16.mxu0 0
    %324 = vmatpush1.bf16.msra.mxu0 %v303
    %325 = vmatprep.subr.bf16.mxu0 0
    %326 = vmatpush1.bf16.msra.mxu0 %v304
    %327 = vmatprep.subr.bf16.mxu0 0
    %328 = vmatpush1.bf16.msra.mxu0 %v305
    %329 = vmatprep.subr.bf16.mxu0 0
    %330 = vmatpush1.bf16.msra.mxu0 %v306
    %331 = vmatprep.subr.bf16.mxu0 0
    %332 = vmatpush1.bf16.msra.mxu0 0
    %333 = vmatprep.subr.bf16.mxu0 0
    %334 = vmatpush1.bf16.msra.mxu0 0
    %335 = vmatprep.subr.bf16.mxu0 0
    %336 = vmatpush1.bf16.msra.mxu0 0
    %337 = vmatprep.subr.bf16.mxu0 0
    %338 = vmatpush1.bf16.msra.mxu0 0
    %339 = vmatprep.subr.bf16.mxu0 0
    %340 = vmatpush1.bf16.msra.mxu0 0
    %341 = vmatprep.subr.bf16.mxu0 0
    %342 = vmatpush1.bf16.msra.mxu0 0
    %343 = vmatprep.subr.bf16.mxu0 0
    %344 = vmatpush1.bf16.msra.mxu0 0
    %345 = vmatprep.subr.bf16.mxu0 0
    %346 = vmatpush1.bf16.msra.mxu0 0
    %347 = vmatprep.mubr.bf16.mxu0 0
    %348 = vmatmul.mubr.bf16.gmra.mrb[0].mxu0 %v243
    %v349 = vpop.f32.mrb[0].mxu0
    %v350 = vadd.f32 %v265, %v349
    %v351 = vpop.f32.mrb[0].mxu0
    %v352 = vpop.f32.mrb[0].mxu0
    %v353 = vadd.f32 %v265, %v352
    %v354 = vpop.f32.mrb[0].mxu0
    %355 = vdwg.mxu0
    %v356 = vpack.c.bf16 %v353, %v350
    %v358 = vunpack.c.l.b16 %v356
    %v359 = vunpack.c.h.b16 %v356
    %v360 = vpack.c.b16 %v358, %v358
    %v361 = vpack.c.b16 %v359, %v359
    %364 = vst [vmem:[%s7] sm:$0xf] %v360
    %365 = vst [vmem:[%s7 + $0x4] sm:$0xf] %v361
    // Predicated region
    $region38: #{dnn_forward.1} parent=1 // pred_check
      _
    $region39: #{dnn_forward.1} parent=1 // pred_check_branch
      %367 = sbr.rel (0) target = $region41
    $region40: #{dnn_forward.1} parent=1 // pred_region
      _
    $region41: #{dnn_forward.1} parent=1 // pred_fallthru
      _
    // Predicated region
    $region42: #{dnn_forward.1} parent=1 // pred_check
      _
    $region43: #{dnn_forward.1} parent=1 // pred_check_branch
      %369 = sbr.rel (0) target = $region45
    $region44: #{dnn_forward.1} parent=1 // pred_region
      _
    $region45: #{dnn_forward.1} parent=1 // pred_fallthru
      _
    %370 = vsyncpa [#allocation3], 1
    %371 = vsyncpa [#allocation5], 1

</llo_original>
